<compile_context>
chip_gen: v5e
topology: v5e:2x2
jax: 0.10.0
libtpu: 0.0.40
codegen_flags: <defaults>
</compile_context>

<pallas_src>
import math

import jax
import jax.numpy as jnp
import numpy as np
from jax.experimental import pallas as pl
from jax.experimental.pallas import tpu as pltpu


def _round_up(v, m):
    return ((v + m - 1) // m) * m


def _sam_pos_embed_kernel(coords_ref, pe_ref, out_ref):
    # coords_ref: (TN, 2)  f32   rows = points, cols = (x, y)
    # pe_ref:     (3, 2F)  f32   rows = (freq_x, freq_y, bias); second lane-half
    #                            of the bias row carries the +pi/2 cos phase.
    # out_ref:    (TN, 2F)
    c = coords_ref[...]                      # (TN, 2)
    x = c[:, 0:1]                            # (TN, 1) -> lane-broadcast
    y = c[:, 1:2]                            # (TN, 1)
    # Lane-dense over the full 2F output width (cos(a) == sin(a + pi/2)).
    ang = x * pe_ref[0:1, :] + y * pe_ref[1:2, :] + pe_ref[2:3, :]   # (TN, 2F)
    out_ref[...] = jnp.sin(ang).astype(out_ref.dtype)


# Live-tile VMEM budget (double-buffered).  Chosen to fit every generation's
# physical VMEM (v7x: 64 MiB) with headroom for compiler scratch.
_VMEM_BUDGET = 48 << 20


def sam_positional_embedding(input_coords, positional_embedding, input_shape=None,
                             *, tile_n=8192, out_dtype=None):
    """Pallas implementation of SamPositionalEmbedding.forward.

    input_coords:          [bs, *num_points, 2]      (x, y) in pixels (or [0,1])
    positional_embedding:  [2, num_pos_feats]
    input_shape:           optional (h, w)
    out_dtype:             output dtype (default = embedding dtype). Pass
                           jnp.bfloat16 to halve the HBM writeback stream when
                           the consumer accepts it (kernel is writeback-bound).
    returns:               [bs, *num_points, 2 * num_pos_feats]
    """
    lead_shape = input_coords.shape[:-1]
    n = int(np.prod(lead_shape)) if lead_shape else 1
    num_pos_feats = positional_embedding.shape[1]
    out_feats = 2 * num_pos_feats
    if out_dtype is None:
        out_dtype = positional_embedding.dtype

    coords = input_coords.reshape(n, 2).astype(jnp.float32)

    # Fold normalization + affine + 2*pi + the sin/cos split into one (3, 2F)
    # table on the host:
    #   ang_k = 2*pi * ((2*x/w - 1)*pe0[k] + (2*y/h - 1)*pe1[k])
    #         = x*(4*pi/w)*pe0[k] + y*(4*pi/h)*pe1[k] - 2*pi*(pe0[k] + pe1[k])
    #   out   = [sin(ang), cos(ang)] = sin([ang, ang + pi/2])
    pe = positional_embedding.astype(jnp.float32)
    two_pi = 2.0 * math.pi
    if input_shape is not None:
        inv_x = 1.0 / jnp.asarray(input_shape[1], jnp.float32)   # x / w
        inv_y = 1.0 / jnp.asarray(input_shape[0], jnp.float32)   # y / h
    else:
        inv_x = jnp.float32(1.0)
        inv_y = jnp.float32(1.0)
    freq_x = (2.0 * two_pi) * inv_x * pe[0]                      # (F,)
    freq_y = (2.0 * two_pi) * inv_y * pe[1]                      # (F,)
    bias = -two_pi * (pe[0] + pe[1])                             # (F,)
    pe_tab = jnp.stack([
        jnp.concatenate([freq_x, freq_x]),                       # (2F,)
        jnp.concatenate([freq_y, freq_y]),
        jnp.concatenate([bias, bias + (0.5 * math.pi)]),         # cos = sin(+pi/2)
    ], axis=0)                                                   # (3, 2F)

    # ---- Tile selection --------------------------------------------------
    # VMEM accounting (per buffer, double-buffered by the pipeline):
    #   coords (tn, 2) f32 lane-pads to (tn, 128)  -> tn*512 B  (NOT 16 KiB!)
    #   out    (tn, 2F)                            -> tn*round_up(2F,128)*itemsize
    #   pe_tab (3, 2F) sublane-pads to (8, 2F)     -> tiny
    out_itemsize = int(np.dtype(out_dtype).itemsize)
    lanes_out = _round_up(out_feats, 128)

    def _tile_vmem_bytes(rows):
        coords_b = rows * 128 * 4
        out_b = rows * lanes_out * out_itemsize
        pe_b = 8 * lanes_out * 4
        return 2 * (coords_b + out_b) + 2 * pe_b

    n8 = max(8, _round_up(n, 8))
    if n8 >= 1024:
        # Keep >= 2 grid steps so dimension_semantics=("parallel",) can shard
        # the grid across both v7x TensorCores (harmless on 1-TC v5e/v6e).
        target = _round_up(-(-n8 // 2), 8)
    else:
        target = n8
    tn = max(8, min(int(tile_n), target))
    tn = max(8, (tn // 8) * 8)
    while _tile_vmem_bytes(tn) > _VMEM_BUDGET and tn > 8:
        tn = max(8, _round_up(tn // 2, 8))

    grid = (-(-n // tn),)
    vmem_limit = int(max(16 << 20, min(_tile_vmem_bytes(tn) + (4 << 20), 56 << 20)))

    out = pl.pallas_call(
        _sam_pos_embed_kernel,
        out_shape=jax.ShapeDtypeStruct((n, out_feats), out_dtype),
        grid_spec=pltpu.PrefetchScalarGridSpec(
            num_scalar_prefetch=0,
            grid=grid,
            in_specs=[
                pl.BlockSpec((tn, 2), lambda i: (i, 0)),            # coords tile
                pl.BlockSpec((3, out_feats), lambda i: (0, 0)),     # folded table
            ],
            out_specs=pl.BlockSpec((tn, out_feats), lambda i: (i, 0)),
        ),
        compiler_params=pltpu.CompilerParams(
            dimension_semantics=("parallel",),
            vmem_limit_bytes=vmem_limit),
    )(coords, pe_tab)

    return out.reshape(*lead_shape, out_feats)


def _reference(input_coords, positional_embedding, input_shape=None):
    coords = input_coords.astype(jnp.float32)
    if input_shape is not None:
        coords = coords.at[..., 0].divide(jnp.asarray(input_shape[1], jnp.float32))
        coords = coords.at[..., 1].divide(jnp.asarray(input_shape[0], jnp.float32))
    coords = 2.0 * coords - 1.0
    coords = coords @ positional_embedding.astype(jnp.float32)
    coords = 2.0 * math.pi * coords
    return jnp.concatenate([jnp.sin(coords), jnp.cos(coords)], axis=-1)


if __name__ == "__main__":
    # Config (small, consistent with SamVisionConfig-style fields).
    hidden_size = 32
    num_pos_feats = 64
    scale = hidden_size // 2

    key = jax.random.PRNGKey(0)
    k_pe, k_coords = jax.random.split(key)

    # Deterministic "buffer" init: scale * randn((2, num_pos_feats))
    positional_embedding = scale * jax.random.normal(
        k_pe, (2, num_pos_feats), dtype=jnp.float32)

    # NOTE on tolerance: angles are O(100) (scale=16, 2*pi factor), so the
    # host-folded affine + the sin(+pi/2) cos fold differ from the f32
    # reference by a few angle-ulps (~1e-4 in sin).  1e-3 still catches any
    # scaling / bias / phase mistake since outputs live in [-1, 1].
    TOL = 1e-3

    # Case 1: prompt points in pixel space [bs, num_points, 2] with (h, w).
    bs, num_points = 2, 8
    h, w = 16, 16
    input_coords = jax.random.uniform(
        k_coords, (bs, num_points, 2), dtype=jnp.float32,
        minval=0.0, maxval=float(w))
    input_shape = (h, w)

    out = sam_positional_embedding(input_coords, positional_embedding, input_shape)
    out = jax.block_until_ready(out)
    ref = _reference(input_coords, positional_embedding, input_shape)
    assert out.shape == (bs, num_points, 2 * num_pos_feats), out.shape
    np.testing.assert_allclose(np.asarray(out), np.asarray(ref), atol=TOL, rtol=0)

    # Case 2: dense image grid of normalized coords [gh, gw, 2], no input_shape.
    gh, gw = 8, 8
    ys = (jnp.arange(gh, dtype=jnp.float32) + 0.5) / gh
    xs = (jnp.arange(gw, dtype=jnp.float32) + 0.5) / gw
    grid_coords = jnp.stack(
        [jnp.tile(xs[None, :], (gh, 1)), jnp.tile(ys[:, None], (1, gw))], axis=-1)
    out2 = sam_positional_embedding(grid_coords, positional_embedding, None)
    out2 = jax.block_until_ready(out2)
    ref2 = _reference(grid_coords, positional_embedding, None)
    assert out2.shape == (gh, gw, 2 * num_pos_feats), out2.shape
    np.testing.assert_allclose(np.asarray(out2), np.asarray(ref2), atol=TOL, rtol=0)

    # Case 3: bf16 writeback path (halves the HBM store stream; looser tol).
    out3 = sam_positional_embedding(input_coords, positional_embedding, input_shape,
                                    out_dtype=jnp.bfloat16)
    out3 = jax.block_until_ready(out3)
    np.testing.assert_allclose(np.asarray(out3, dtype=np.float32), np.asarray(ref),
                               atol=2e-2, rtol=0)

    print("KERNEL_OK")
</pallas_src>

<mosaic_0001>
module attributes {stable_mosaic.version = 11 : i64} {
  func.func @_sam_pos_embed_kernel(%arg0: i32, %arg1: memref<16x2xf32, #tpu.memory_space<vmem>>, %arg2: memref<3x128xf32, #tpu.memory_space<vmem>>, %arg3: memref<16x128xf32, #tpu.memory_space<vmem>>) attributes {dimension_semantics = [#tpu.dimension_semantics<parallel>], iteration_bounds = array<i64: 1>, scalar_prefetch = 0 : i64, scratch_operands = 0 : i64, tpu.core_type = #tpu.core_type<tc>, window_params = [{transform_indices = @transform_0, window_bounds = array<i64: 16, 2>}, {pipeline_mode = #tpu.pipeline_mode<synchronous>, transform_indices = @transform_1, window_bounds = array<i64: 3, 128>}, {transform_indices = @transform_2, window_bounds = array<i64: 16, 128>}]} {
    %c0 = arith.constant 0 : index
    %c0_0 = arith.constant 0 : index
    %0 = vector.load %arg1[%c0, %c0_0] : memref<16x2xf32, #tpu.memory_space<vmem>>, vector<16x2xf32>
    %1 = vector.extract_strided_slice %0 {offsets = [0, 0], sizes = [16, 1], strides = [1, 1]} : vector<16x2xf32> to vector<16x1xf32>
    %2 = vector.extract_strided_slice %0 {offsets = [0, 1], sizes = [16, 1], strides = [1, 1]} : vector<16x2xf32> to vector<16x1xf32>
    %c0_1 = arith.constant 0 : index
    %c0_2 = arith.constant 0 : index
    %3 = vector.load %arg2[%c0_1, %c0_2] : memref<3x128xf32, #tpu.memory_space<vmem>>, vector<1x128xf32>
    %4 = vector.broadcast %1 : vector<16x1xf32> to vector<16x128xf32>
    %5 = vector.broadcast %3 : vector<1x128xf32> to vector<16x128xf32>
    %6 = arith.mulf %4, %5 : vector<16x128xf32>
    %c1 = arith.constant 1 : index
    %c0_3 = arith.constant 0 : index
    %7 = vector.load %arg2[%c1, %c0_3] : memref<3x128xf32, #tpu.memory_space<vmem>>, vector<1x128xf32>
    %8 = vector.broadcast %2 : vector<16x1xf32> to vector<16x128xf32>
    %9 = vector.broadcast %7 : vector<1x128xf32> to vector<16x128xf32>
    %10 = arith.mulf %8, %9 : vector<16x128xf32>
    %11 = arith.addf %6, %10 : vector<16x128xf32>
    %c2 = arith.constant 2 : index
    %c0_4 = arith.constant 0 : index
    %12 = vector.load %arg2[%c2, %c0_4] : memref<3x128xf32, #tpu.memory_space<vmem>>, vector<1x128xf32>
    %13 = vector.broadcast %12 : vector<1x128xf32> to vector<16x128xf32>
    %14 = arith.addf %11, %13 : vector<16x128xf32>
    %15 = math.sin %14 : vector<16x128xf32>
    %c0_5 = arith.constant 0 : index
    %c0_6 = arith.constant 0 : index
    %16 = vector.load %arg3[%c0_5, %c0_6] : memref<16x128xf32, #tpu.memory_space<vmem>>, vector<16x128xf32>
    tpu.vector_store %arg3[%c0_5, %c0_6], %15 {strides = array<i32>} : memref<16x128xf32, #tpu.memory_space<vmem>>, vector<16x128xf32>,
    return
  }
  func.func @transform_0(%arg0: i32) -> (i32, i32) {
    %c0_i32 = arith.constant 0 : i32
    %c0_i32_0 = arith.constant 0 : i32
    return %arg0, %c0_i32 : i32, i32
  }
  func.func @transform_1(%arg0: i32) -> (i32, i32) {
    %c0_i32 = arith.constant 0 : i32
    %c0_i32_0 = arith.constant 0 : i32
    %c0_i32_1 = arith.constant 0 : i32
    return %c0_i32, %c0_i32_0 : i32, i32
  }
  func.func @transform_2(%arg0: i32) -> (i32, i32) {
    %c0_i32 = arith.constant 0 : i32
    %c0_i32_0 = arith.constant 0 : i32
    return %arg0, %c0_i32 : i32, i32
  }
}

</mosaic_0001>

<llo_original>
// kernel: tpu_custom_call.1
$region0: #{tpu_custom_call.1}
  #allocation0 [shape = 'u32[]', space=smem, size = 0x4, offset = 0x4, fixed_abs, tag = 'smem constant byte address 0x4 - core index']
  #allocation1 [shape = 'u32[72,128]{1,0:T(1,128)}', space=vmem, size = 0x9000, scoped, tag = 'internal scratch']
  %s0 = inlined_call_operand.vmem [shape: f32[16,2], index: 0, kind: input, shape index: {}]
  %s1 = inlined_call_operand.vmem [shape: f32[3,128], index: 1, kind: input, shape index: {}]
  %s2 = inlined_call_operand.hbm [shape: f32[16,128], index: 2, kind: output, shape index: {}]
  %s3 = sld [smem:[#allocation0]]
  $region18: #{tpu_custom_call.1} parent=0
    _
  %s5 = ssub.s32 1, %s3
  %s6 = scalar_select 0, %s5, %s3
  $region1: #{tpu_custom_call.1} parent=0
    #allocation2 [shape = 'u8[8192]{0}', space=vmem, size = 0x2000, scoped, tag = 'output window, operand 0, single buffered']
    #allocation3 [shape = 's32[1]{0}', space=sflag, size = 0x4, scoped, tag = 'scoped memory for tpu_custom_call.1']
    %7 = vsyncpa [#allocation3], 0
    // Predicated region
    $region2: #{tpu_custom_call.1} parent=1 // pred_check
      _
    $region3: #{tpu_custom_call.1} parent=1 // pred_check_branch
      %9 = sbr.rel (0) target = $region5
    $region4: #{tpu_custom_call.1} parent=1 // pred_region
      _
    $region5: #{tpu_custom_call.1} parent=1 // pred_fallthru
      _
    // Predicated region
    $region6: #{tpu_custom_call.1} parent=1 // pred_check
      _
    $region7: #{tpu_custom_call.1} parent=1 // pred_check_branch
      %11 = sbr.rel (0) target = $region9
    $region8: #{tpu_custom_call.1} parent=1 // pred_region
      _
    $region9: #{tpu_custom_call.1} parent=1 // pred_fallthru
      _
    %v12 = vld [vmem:[%s0] sm:$0xff]
    %v13 = vld [vmem:[%s0 + $0x8] sm:$0xff]
    %v14 = vld [vmem:[%s1] sm:$0x1]
    %16 = vset.pattern.permute.xlu0 0
    %17 = vperm.xlu0 %16, %v12
    %v18 = vpop.permute.xlu0 %17
    %21 = vset.pattern.permute.xlu0 0
    %22 = vperm.xlu0 %21, %v13
    %v23 = vpop.permute.xlu0 %22
    %v25 = vperm.slane %v14, 0
    %v26 = vmul.f32 %v18, %v25
    %v27 = vmul.f32 %v23, %v25
    %v28 = vld [vmem:[%s1 + $0x1] sm:$0x1]
    %29 = vset.pattern.permute.xlu0 1
    %30 = vperm.xlu0 %29, %v12
    %v31 = vpop.permute.xlu0 %30
    %33 = vset.pattern.permute.xlu0 1
    %34 = vperm.xlu0 %33, %v13
    %v35 = vpop.permute.xlu0 %34
    %v37 = vperm.slane %v28, 0
    %v38 = vmul.f32 %v31, %v37
    %v39 = vmul.f32 %v35, %v37
    %v40 = vadd.f32 %v26, %v38
    %v41 = vadd.f32 %v27, %v39
    %v42 = vld [vmem:[%s1 + $0x2] sm:$0x1]
    %v43 = vperm.slane %v42, 0
    %v44 = vadd.f32 %v40, %v43
    %v45 = vadd.f32 %v41, %v43
    %v46 = vand.u32 2147483647, %v44
    %vm47 = vcmp.le.f32.partialorder %v46, 0.7853982
    %vm48 = vcmp.lt.s32.totalorder %v44, 0
    %v49 = vand.u32 %v44, 2139095040
    %v50 = vshrl.u32 %v49, 23
    %v51 = vsub.s32 %v50, 127
    %v52 = vand.u32 2147483647, %v44
    %v53 = vand.u32 %v52, 8388607
    %v54 = vor.u32 %v53, 8388608
    %v55 = vsub.s32 0, %v54
    %v56 = vadd.s32 %v51, 1
    %vm57 = vcmp.gt.s32.totalorder %v56, 0
    %v58 = vsel %vm57, %v56, 0
    %v59 = vshrl.u32 %v58, 5
    %v60 = vand.u32 %v58, 31
    %v61 = vsub.s32 32, %v60
    %v62 = vshrl.u32 683565275, %v61
    %v63 = vshll.u32 683565275, %v60
    %v64 = vshrl.u32 2475754826, %v61
    %v65 = vor.u32 %v63, %v64
    %v66 = vshll.u32 2475754826, %v60
    %v67 = vshrl.u32 2131351028, %v61
    %v68 = vor.u32 %v66, %v67
    %v69 = vshll.u32 2131351028, %v60
    %v70 = vshrl.u32 2102212464, %v61
    %v71 = vor.u32 %v69, %v70
    %v72 = vshll.u32 2102212464, %v60
    %v73 = vshrl.u32 920167782, %v61
    %v74 = vor.u32 %v72, %v73
    %v75 = vshll.u32 920167782, %v60
    %v76 = vshrl.u32 1326507024, %v61
    %v77 = vor.u32 %v75, %v76
    %vm78 = vcmp.lt.s32.totalorder %v59, 1
    %vm79 = vcmp.lt.s32.totalorder %v59, 2
    %vm80 = vcmp.lt.s32.totalorder %v59, 3
    %vm81 = vcmp.lt.s32.totalorder %v59, 4
    %v82 = vsel %vm78, %v62, %v65
    %v83 = vsel %vm81, %v71, 2102212464
    %v84 = vsel %vm80, %v68, %v83
    %v85 = vsel %vm79, %v82, %v84
    %v86 = vsel %vm78, %v65, %v68
    %v87 = vsel %vm81, %v74, 920167782
    %v88 = vsel %vm80, %v71, %v87
    %v89 = vsel %vm79, %v86, %v88
    %v90 = vsel %vm78, %v68, %v71
    %v91 = vsel %vm81, %v77, 1326507024
    %v92 = vsel %vm80, %v74, %v91
    %v93 = vsel %vm79, %v90, %v92
    %v94 = vshll.u32 %v54, 8
    %v95 = vand.u32 %v94, 65535
    %v96 = vshrl.u32 %v94, 16
    %v97 = vand.u32 %v93, 65535
    %v98 = vshrl.u32 %v93, 16
    %v99 = vmul.u32 %v95, %v97
    %v100 = vmul.u32 %v95, %v98
    %v101 = vmul.u32 %v96, %v97
    %v102 = vmul.u32 %v96, %v98
    %v103 = vshll.u32 %v100, 16
    %v104 = vshrl.u32 %v100, 16
    %v105 = vshll.u32 %v101, 16
    %v106 = vshrl.u32 %v101, 16
    %vm107 = vc.u32 %v99, %v103
    %v108 = vsel %vm107, 1, 0
    %v109 = vadd.s32 %v99, %v103
    %v110 = vadd.s32 %v102, %v108
    %vm111 = vc.u32 %v109, %v105
    %v112 = vsel %vm111, 1, 0
    %v113 = vadd.s32 %v109, %v105
    %v114 = vadd.s32 %v110, %v112
    %v115 = vadd.s32 %v114, %v104
    %v116 = vadd.s32 %v115, %v106
    %v117 = vand.u32 %v94, 65535
    %v118 = vshrl.u32 %v94, 16
    %v119 = vand.u32 %v89, 65535
    %v120 = vshrl.u32 %v89, 16
    %v121 = vmul.u32 %v117, %v119
    %v122 = vmul.u32 %v117, %v120
    %v123 = vmul.u32 %v118, %v119
    %v124 = vmul.u32 %v118, %v120
    %v125 = vshll.u32 %v122, 16
    %v126 = vshrl.u32 %v122, 16
    %v127 = vshll.u32 %v123, 16
    %v128 = vshrl.u32 %v123, 16
    %vm129 = vc.u32 %v121, %v125
    %v130 = vsel %vm129, 1, 0
    %v131 = vadd.s32 %v121, %v125
    %v132 = vadd.s32 %v124, %v130
    %vm133 = vc.u32 %v131, %v127
    %v134 = vsel %vm133, 1, 0
    %v135 = vadd.s32 %v131, %v127
    %v136 = vadd.s32 %v132, %v134
    %v137 = vadd.s32 %v136, %v126
    %v138 = vadd.s32 %v137, %v128
    %v139 = vmul.u32 %v94, %v85
    %v140 = vadd.s32 %v116, %v135
    %vm141 = vc.u32 %v116, %v135
    %v142 = vadd.s32 %v138, 1
    %v143 = vsel %vm141, %v142, %v138
    %v144 = vadd.s32 %v139, %v143
    %v145 = vadd.s32 %v144, 536870912
    %v146 = vshrl.u32 %v145, 30
    %v147 = vshll.u32 %v146, 30
    %v148 = vsub.s32 %v144, %v147
    %vm149 = vcmp.lt.s32.totalorder %v148, 0
    %v150 = vsub.s32 0, %v148
    %v151 = vsel %vm149, %v150, %v148
    %v152 = vclz %v151
    %v153 = vsub.s32 %v152, 2
    %vm154 = vcmp.gt.s32.totalorder 0, %v153
    %v155 = vsel %vm154, 0, %v153
    %v156 = vsub.s32 32, %v155
    %v157 = vshll.u32 %v148, %v155
    %v158 = vshrl.u32 %v140, %v156
    %v159 = vor.u32 %v157, %v158
    %v160 = vsub.s32 4294967266, %v155
    %v161 = vadd.s32 %v160, 127
    %v162 = vshll.u32 %v161, 23
    %v163 = vor.u32 4788187, %v162
    %v164 = vand.u32 2147483647, %v163
    %v166 = vcvt.s32.f32 %v159
    %v167 = vmul.f32 %v166, %v164
    %v168 = vxor.u32 %v167, 2147483648
    %v169 = vsel %vm48, %v168, %v167
    %v170 = vsub.s32 4, %v146
    %v171 = vsel %vm48, %v170, %v146
    %v172 = vsel %vm47, %v44, %v169
    %v173 = vsel %vm47, 0, %v171
    %v174 = vmul.f32 %v172, %v172
    %v175 = vmul.f32 %v174, -0.001358992
    %v176 = vadd.f32 %v175, 0.041655596
    %v177 = vmul.f32 %v174, %v176
    %v178 = vadd.f32 %v177, -0.4999988
    %v179 = vmul.f32 %v174, %v178
    %v180 = vadd.f32 1.0, %v179
    %v181 = vmul.f32 %v172, %v172
    %v182 = vmul.f32 %v181, -0.00019511016
    %v183 = vadd.f32 %v182, 0.008332121
    %v184 = vmul.f32 %v181, %v183
    %v185 = vadd.f32 %v184, -0.16666654
    %v186 = vmul.f32 %v181, %v185
    %v187 = vadd.f32 %v186, 1.0
    %v188 = vmul.f32 %v187, %v172
    %vm189 = vweird.f32 %v44
    %v190 = vadd.s32 %v173, 3
    %v191 = vand.u32 %v190, 3
    %vm192 = vcmp.lt.s32.totalorder %v191, 2
    %vm193 = vcmp.eq.s32.totalorder %v191, 0
    %v194 = vxor.u32 %v188, 2147483648
    %v195 = vsel %vm193, %v180, %v194
    %vm196 = vcmp.eq.s32.totalorder %v191, 2
    %v197 = vxor.u32 %v180, 2147483648
    %v198 = vsel %vm196, %v197, %v188
    %v199 = vsel %vm192, %v195, %v198
    %v200 = vsel %vm189, nan, %v199
    %v201 = vand.u32 2147483647, %v45
    %vm202 = vcmp.le.f32.partialorder %v201, 0.7853982
    %vm203 = vcmp.lt.s32.totalorder %v45, 0
    %v204 = vand.u32 %v45, 2139095040
    %v205 = vshrl.u32 %v204, 23
    %v206 = vsub.s32 %v205, 127
    %v207 = vand.u32 2147483647, %v45
    %v208 = vand.u32 %v207, 8388607
    %v209 = vor.u32 %v208, 8388608
    %v210 = vsub.s32 0, %v209
    %v211 = vadd.s32 %v206, 1
    %vm212 = vcmp.gt.s32.totalorder %v211, 0
    %v213 = vsel %vm212, %v211, 0
    %v214 = vshrl.u32 %v213, 5
    %v215 = vand.u32 %v213, 31
    %v216 = vsub.s32 32, %v215
    %v217 = vshrl.u32 683565275, %v216
    %v218 = vshll.u32 683565275, %v215
    %v219 = vshrl.u32 2475754826, %v216
    %v220 = vor.u32 %v218, %v219
    %v221 = vshll.u32 2475754826, %v215
    %v222 = vshrl.u32 2131351028, %v216
    %v223 = vor.u32 %v221, %v222
    %v224 = vshll.u32 2131351028, %v215
    %v225 = vshrl.u32 2102212464, %v216
    %v226 = vor.u32 %v224, %v225
    %v227 = vshll.u32 2102212464, %v215
    %v228 = vshrl.u32 920167782, %v216
    %v229 = vor.u32 %v227, %v228
    %v230 = vshll.u32 920167782, %v215
    %v231 = vshrl.u32 1326507024, %v216
    %v232 = vor.u32 %v230, %v231
    %vm233 = vcmp.lt.s32.totalorder %v214, 1
    %vm234 = vcmp.lt.s32.totalorder %v214, 2
    %vm235 = vcmp.lt.s32.totalorder %v214, 3
    %vm236 = vcmp.lt.s32.totalorder %v214, 4
    %v237 = vsel %vm233, %v217, %v220
    %v238 = vsel %vm236, %v226, 2102212464
    %v239 = vsel %vm235, %v223, %v238
    %v240 = vsel %vm234, %v237, %v239
    %v241 = vsel %vm233, %v220, %v223
    %v242 = vsel %vm236, %v229, 920167782
    %v243 = vsel %vm235, %v226, %v242
    %v244 = vsel %vm234, %v241, %v243
    %v245 = vsel %vm233, %v223, %v226
    %v246 = vsel %vm236, %v232, 1326507024
    %v247 = vsel %vm235, %v229, %v246
    %v248 = vsel %vm234, %v245, %v247
    %v249 = vshll.u32 %v209, 8
    %v250 = vand.u32 %v249, 65535
    %v251 = vshrl.u32 %v249, 16
    %v252 = vand.u32 %v248, 65535
    %v253 = vshrl.u32 %v248, 16
    %v254 = vmul.u32 %v250, %v252
    %v255 = vmul.u32 %v250, %v253
    %v256 = vmul.u32 %v251, %v252
    %v257 = vmul.u32 %v251, %v253
    %v258 = vshll.u32 %v255, 16
    %v259 = vshrl.u32 %v255, 16
    %v260 = vshll.u32 %v256, 16
    %v261 = vshrl.u32 %v256, 16
    %vm262 = vc.u32 %v254, %v258
    %v263 = vsel %vm262, 1, 0
    %v264 = vadd.s32 %v254, %v258
    %v265 = vadd.s32 %v257, %v263
    %vm266 = vc.u32 %v264, %v260
    %v267 = vsel %vm266, 1, 0
    %v268 = vadd.s32 %v264, %v260
    %v269 = vadd.s32 %v265, %v267
    %v270 = vadd.s32 %v269, %v259
    %v271 = vadd.s32 %v270, %v261
    %v272 = vand.u32 %v249, 65535
    %v273 = vshrl.u32 %v249, 16
    %v274 = vand.u32 %v244, 65535
    %v275 = vshrl.u32 %v244, 16
    %v276 = vmul.u32 %v272, %v274
    %v277 = vmul.u32 %v272, %v275
    %v278 = vmul.u32 %v273, %v274
    %v279 = vmul.u32 %v273, %v275
    %v280 = vshll.u32 %v277, 16
    %v281 = vshrl.u32 %v277, 16
    %v282 = vshll.u32 %v278, 16
    %v283 = vshrl.u32 %v278, 16
    %vm284 = vc.u32 %v276, %v280
    %v285 = vsel %vm284, 1, 0
    %v286 = vadd.s32 %v276, %v280
    %v287 = vadd.s32 %v279, %v285
    %vm288 = vc.u32 %v286, %v282
    %v289 = vsel %vm288, 1, 0
    %v290 = vadd.s32 %v286, %v282
    %v291 = vadd.s32 %v287, %v289
    %v292 = vadd.s32 %v291, %v281
    %v293 = vadd.s32 %v292, %v283
    %v294 = vmul.u32 %v249, %v240
    %v295 = vadd.s32 %v271, %v290
    %vm296 = vc.u32 %v271, %v290
    %v297 = vadd.s32 %v293, 1
    %v298 = vsel %vm296, %v297, %v293
    %v299 = vadd.s32 %v294, %v298
    %v300 = vadd.s32 %v299, 536870912
    %v301 = vshrl.u32 %v300, 30
    %v302 = vshll.u32 %v301, 30
    %v303 = vsub.s32 %v299, %v302
    %vm304 = vcmp.lt.s32.totalorder %v303, 0
    %v305 = vsub.s32 0, %v303
    %v306 = vsel %vm304, %v305, %v303
    %v307 = vclz %v306
    %v308 = vsub.s32 %v307, 2
    %vm309 = vcmp.gt.s32.totalorder 0, %v308
    %v310 = vsel %vm309, 0, %v308
    %v311 = vsub.s32 32, %v310
    %v312 = vshll.u32 %v303, %v310
    %v313 = vshrl.u32 %v295, %v311
    %v314 = vor.u32 %v312, %v313
    %v315 = vsub.s32 4294967266, %v310
    %v316 = vadd.s32 %v315, 127
    %v317 = vshll.u32 %v316, 23
    %v318 = vor.u32 4788187, %v317
    %v319 = vand.u32 2147483647, %v318
    %v321 = vcvt.s32.f32 %v314
    %v322 = vmul.f32 %v321, %v319
    %v323 = vxor.u32 %v322, 2147483648
    %v324 = vsel %vm203, %v323, %v322
    %v325 = vsub.s32 4, %v301
    %v326 = vsel %vm203, %v325, %v301
    %v327 = vsel %vm202, %v45, %v324
    %v328 = vsel %vm202, 0, %v326
    %v329 = vmul.f32 %v327, %v327
    %v330 = vmul.f32 %v329, -0.001358992
    %v331 = vadd.f32 %v330, 0.041655596
    %v332 = vmul.f32 %v329, %v331
    %v333 = vadd.f32 %v332, -0.4999988
    %v334 = vmul.f32 %v329, %v333
    %v335 = vadd.f32 1.0, %v334
    %v336 = vmul.f32 %v327, %v327
    %v337 = vmul.f32 %v336, -0.00019511016
    %v338 = vadd.f32 %v337, 0.008332121
    %v339 = vmul.f32 %v336, %v338
    %v340 = vadd.f32 %v339, -0.16666654
    %v341 = vmul.f32 %v336, %v340
    %v342 = vadd.f32 %v341, 1.0
    %v343 = vmul.f32 %v342, %v327
    %vm344 = vweird.f32 %v45
    %v345 = vadd.s32 %v328, 3
    %v346 = vand.u32 %v345, 3
    %vm347 = vcmp.lt.s32.totalorder %v346, 2
    %vm348 = vcmp.eq.s32.totalorder %v346, 0
    %v349 = vxor.u32 %v343, 2147483648
    %v350 = vsel %vm348, %v335, %v349
    %vm351 = vcmp.eq.s32.totalorder %v346, 2
    %v352 = vxor.u32 %v335, 2147483648
    %v353 = vsel %vm351, %v352, %v343
    %v354 = vsel %vm347, %v350, %v353
    %v355 = vsel %vm344, nan, %v354
    %356 = vst [vmem:[#allocation2] sm:$0xff] %v200
    %357 = vst [vmem:[#allocation2 + $0x8] sm:$0xff] %v355
    // Predicated region
    $region10: #{tpu_custom_call.1} parent=1 // pred_check
      _
    $region11: #{tpu_custom_call.1} parent=1 // pred_check_branch
      %359 = sbr.rel (0) target = $region13
    $region12: #{tpu_custom_call.1} parent=1 // pred_region
      %361 = vsyncadd [#allocation3], 0
      %s362 = sshll.u32 [#allocation2], 4
      %s363 = int_to_ptr.vmem [resolvable:$true] %s362
      %s364 = sshll.u32 %s2, 4
      %s365 = int_to_ptr.hbm [resolvable:$true] %s364
      %370 = dma.vmem_to_hbm [thread:$0]  %s363, 256, %s365, [#allocation3], 128, 128, 8
    $region13: #{tpu_custom_call.1} parent=1 // pred_fallthru
      _
    // Predicated region
    $region14: #{tpu_custom_call.1} parent=1 // pred_check
      _
    $region15: #{tpu_custom_call.1} parent=1 // pred_check_branch
      %372 = sbr.rel (0) target = $region17
    $region16: #{tpu_custom_call.1} parent=1 // pred_region
      %374 = dma.done [#allocation3], 256
    $region17: #{tpu_custom_call.1} parent=1 // pred_fallthru
      _
    %375 = vsyncpa [#allocation3], 1

</llo_original>
